<compile_context>
chip_gen: v6e
topology: v6e:2x2x1
jax: 0.10.0
libtpu: 0.0.40
codegen_flags: <defaults>
</compile_context>

<pallas_src>
import jax
import jax.numpy as jnp
from jax.experimental import pallas as pl
from jax.experimental.pallas import tpu as pltpu

# ---------------- model hyper-parameters (small, self-consistent) -----------
B = 2                    # batch
S = 1024                 # source audio samples
FRAME = 64               # samples per ASR frame
T_FRAMES = S // FRAME    # 16 frames
C_ASR = 32               # ASR "text info" channels
N_MELS = 80              # mel bins for the VAE speaker encoder
T_MEL = 16               # mel time steps
D_SPK = 16               # speaker latent dim
UP = 64                  # generator upsample factor (samples per frame)

R2 = B * T_FRAMES // 2   # rows after pairing 2 frames per row (lane-dense) = 16

# ---- constant-slab layout (row offsets aligned to 8 sublanes) ---------------
W_MULV_R0 = 0                     # (N_MELS, 2*D_SPK)   rows   0..79,  lanes 0..31
W_SPK_R0 = 80                     # (D_SPK, 2*C_ASR)    rows  80..95,  lanes 0..63
B_SPK_R0 = 96                     # (1, 2*C_ASR)        row   96,      lanes 0..63
EPS_R0 = 104                      # (B, D_SPK)          rows 104..105, lanes 0..15
SEL_R0 = 112                      # (R2, B)             rows 112..127, lanes 0..1
POOL_R0 = 128                     # (B, B*T_MEL)        rows 128..129, lanes 0..31
CONST_ROWS = 136                  # padded to a multiple of 8

_VMEM = pl.BlockSpec(memory_space=pltpu.MemorySpace.VMEM)


# ---------------- fused Pallas kernel ----------------------------------------
def _hifivc_fused_kernel(frames_ref, mel_ref, const_ref, w_asr_ref, w_gen_ref,
                         audio_ref, text_spk_ref):
    f32 = jnp.float32

    # ---- unpack the static constant slab (static slices, tiny loads) --------
    w_mulv = const_ref[W_MULV_R0:W_MULV_R0 + N_MELS, 0:2 * D_SPK]     # (80, 32)
    w_spk = const_ref[W_SPK_R0:W_SPK_R0 + D_SPK, 0:2 * C_ASR]         # (16, 64)
    b_spk = const_ref[B_SPK_R0:B_SPK_R0 + 1, 0:2 * C_ASR]             # (1, 64)
    eps = const_ref[EPS_R0:EPS_R0 + B, 0:D_SPK]                       # (2, 16)
    sel = const_ref[SEL_R0:SEL_R0 + R2, 0:B]                          # (16, 2)
    poolsel = const_ref[POOL_R0:POOL_R0 + B, 0:B * T_MEL]             # (2, 32)

    # ---- AsrModel: framed mono audio -> paired "text" features --------------
    # frames: (R2, 2F) = (16, 128) lane-dense; w_asr: (2F, 2C) block-diagonal
    # frame-pair weights -> text: (R2, 2C) = two consecutive frames' channel
    # vectors packed per row. Single 2-D MXU dot, no per-batch loop.
    text = jnp.dot(frames_ref[...], w_asr_ref[...], preferred_element_type=f32)

    # ---- VAE speaker encoder -------------------------------------------------
    # mel: (B*T_MEL, N_MELS) lane-dense; time-pool via precomputed averaging-
    # selector matmul, then ONE merged mu|logvar projection (32-lane result).
    pooled = jnp.dot(poolsel, mel_ref[...], preferred_element_type=f32)   # (B, 80)
    mulv = jnp.dot(pooled, w_mulv, preferred_element_type=f32)            # (B, 32)
    mean = mulv[:, 0:D_SPK]
    logvar = mulv[:, D_SPK:2 * D_SPK]
    std = jnp.exp(0.5 * logvar)
    result = mean + std * eps                                             # reparam

    # ---- Generator -----------------------------------------------------------
    # speaker conditioning (already duplicated for the 2-frame packing), then
    # a precomputed one-hot selector matmul broadcasts it onto the row axis.
    cond = jnp.dot(result, w_spk, preferred_element_type=f32) + b_spk     # (B, 2C)
    cond_rows = jnp.dot(sel, cond, preferred_element_type=f32)            # (R2, 2C)

    h = text + cond_rows
    h = jnp.where(h > 0, h, 0.1 * h)                                      # leaky relu
    # upsampling matmul, block-diag frame-pair weights -> (R2, 2*UP) = 128 lanes
    audio_ref[...] = jnp.tanh(
        jnp.dot(h, w_gen_ref[...], preferred_element_type=f32))

    # ---- pack text features + speaker stats into one 128-lane output slab ----
    # lanes 0..63  : paired text features (spectrogram)
    # lanes 64..111: rows 0..B-1 hold [result | mean | std]  (B, 3*D_SPK)
    spk_packed = jnp.concatenate([result, mean, std], axis=-1)            # (B, 48)
    spk_rows = jnp.concatenate(
        [spk_packed, jnp.zeros((R2 - B, 3 * D_SPK), f32)], axis=0)        # (16, 48)
    right = jnp.concatenate(
        [spk_rows, jnp.zeros((R2, 2 * C_ASR - 3 * D_SPK), f32)], axis=-1) # (16, 64)
    text_spk_ref[...] = jnp.concatenate([text, right], axis=-1)           # (16, 128)


def _fused_call(frames_pair, mel_flat, const_slab, w_asr_pair, w_gen_pair):
    # rough scheduling hint for XLA around the custom call
    cost = pl.CostEstimate(flops=560_000, transcendentals=2_080,
                           bytes_accessed=170_000)
    return pl.pallas_call(
        _hifivc_fused_kernel,
        out_shape=(
            jax.ShapeDtypeStruct((R2, 2 * UP), jnp.float32),   # audio, 128 lanes
            jax.ShapeDtypeStruct((R2, 128), jnp.float32),      # text | speaker stats
        ),
        in_specs=[_VMEM] * 5,
        out_specs=(_VMEM, _VMEM),
        cost_estimate=cost,
    )(frames_pair, mel_flat, const_slab, w_asr_pair, w_gen_pair)


# ---------------- parameters --------------------------------------------------
def init_params(key):
    ks = jax.random.split(key, 6)
    scale = 0.1
    w_asr = scale * jax.random.normal(ks[0], (FRAME, C_ASR), jnp.float32)
    w_mu = scale * jax.random.normal(ks[1], (N_MELS, D_SPK), jnp.float32)
    w_lv = scale * jax.random.normal(ks[2], (N_MELS, D_SPK), jnp.float32)
    w_spk = scale * jax.random.normal(ks[3], (D_SPK, C_ASR), jnp.float32)
    b_spk = scale * jax.random.normal(ks[4], (1, C_ASR), jnp.float32)
    w_gen = scale * jax.random.normal(ks[5], (C_ASR, UP), jnp.float32)
    # deterministic reparameterization noise (fixed seed, like a seeded
    # torch.randn_like in the VAE encoder)
    eps = jax.random.normal(jax.random.PRNGKey(123), (B, D_SPK), jnp.float32)

    # ---- one-time packing for the lane-dense, frame-paired kernel layout ----
    z_fc = jnp.zeros((FRAME, C_ASR), jnp.float32)
    z_cu = jnp.zeros((C_ASR, UP), jnp.float32)
    w_asr_pair = jnp.block([[w_asr, z_fc], [z_fc, w_asr]])    # (2F, 2C) = (128, 64)
    w_gen_pair = jnp.block([[w_gen, z_cu], [z_cu, w_gen]])    # (2C, 2U) = (64, 128)
    w_spk_pair = jnp.concatenate([w_spk, w_spk], axis=1)      # (D, 2C)  = (16, 64)
    b_spk_pair = jnp.concatenate([b_spk, b_spk], axis=1)      # (1, 2C)  = (1, 64)
    w_mulv = jnp.concatenate([w_mu, w_lv], axis=1)            # (M, 2D)  = (80, 32)

    # static row -> batch one-hot broadcast selector (R2, B)
    row_b = jnp.arange(R2) // (R2 // B)
    sel = jax.nn.one_hot(row_b, B, dtype=jnp.float32)         # (16, 2)

    # static time-pool averaging selector (B, B*T_MEL)
    pool_rows = jnp.arange(B * T_MEL) // T_MEL
    pool_sel = jax.nn.one_hot(pool_rows, B, dtype=jnp.float32).T / T_MEL  # (2, 32)

    # one pre-padded constant slab -> a single input DMA per forward call
    slab = jnp.zeros((CONST_ROWS, 128), jnp.float32)
    slab = slab.at[W_MULV_R0:W_MULV_R0 + N_MELS, 0:2 * D_SPK].set(w_mulv)
    slab = slab.at[W_SPK_R0:W_SPK_R0 + D_SPK, 0:2 * C_ASR].set(w_spk_pair)
    slab = slab.at[B_SPK_R0:B_SPK_R0 + 1, 0:2 * C_ASR].set(b_spk_pair)
    slab = slab.at[EPS_R0:EPS_R0 + B, 0:D_SPK].set(eps)
    slab = slab.at[SEL_R0:SEL_R0 + R2, 0:B].set(sel)
    slab = slab.at[POOL_R0:POOL_R0 + B, 0:B * T_MEL].set(pool_sel)

    return {
        # logical weights (reference / export)
        "w_asr": w_asr, "w_mu": w_mu, "w_lv": w_lv,
        "w_spk": w_spk, "b_spk": b_spk, "w_gen": w_gen,
        "eps": eps,
        # kernel-layout packed weights
        "w_asr_pair": w_asr_pair, "w_gen_pair": w_gen_pair,
        "const_slab": slab,
    }


# ---------------- HiFiVC forward ----------------------------------------------
def hifivc_forward(params, source_audio, mel_spec, real_audio,
                   f0=None, audio_length=None):
    # AsrModel(source_audio[:, 0, :], audio_length) -- framing is a free,
    # contiguous reshape into a lane-dense (B*T/2, 2*FRAME) = (16, 128) layout.
    mono = source_audio[:, 0, :]                              # (B, S)
    frames_pair = mono.reshape(R2, 2 * FRAME)                 # (16, 128)

    # lane-dense mel: (B, n_mels, T_mel) -> (B*T_mel, n_mels) = (32, 80)
    mel_flat = jnp.transpose(mel_spec, (0, 2, 1)).reshape(B * T_MEL, N_MELS)

    audio_lanes, text_spk = _fused_call(
        frames_pair, mel_flat, params["const_slab"],
        params["w_asr_pair"], params["w_gen_pair"])

    # (B*T/2, 2*UP) row-major == frame-major samples -> (B, 1, S_out), free.
    generated_audio = audio_lanes.reshape(B, 1, T_FRAMES * UP)

    # Torch-style (B, C, T) spectrogram materialized exactly once for the
    # return value (use_f = False -> spectrogram = text_info).
    text_pair = text_spk[:, 0:2 * C_ASR]
    spectrogram = (text_pair
                   .reshape(B, T_FRAMES // 2, 2, C_ASR)
                   .transpose(0, 3, 1, 2)
                   .reshape(B, C_ASR, T_FRAMES))

    # lane-packed speaker stats live in lanes 64..111, rows 0..B-1
    spk = text_spk[0:B, 2 * C_ASR:2 * C_ASR + 3 * D_SPK]
    speaker_info = spk[:, 0:D_SPK]
    mean_info = spk[:, D_SPK:2 * D_SPK]
    std_info = spk[:, 2 * D_SPK:3 * D_SPK]

    return {
        "generated_audio": generated_audio,
        "spectrogram": spectrogram,
        "speaker_info": speaker_info,
        "mean_info": mean_info,
        "std_info": std_info,
    }


# ---------------- pure-JAX reference (for numerical validation) ---------------
def reference_forward(params, source_audio, mel_spec):
    hi = jax.lax.Precision.HIGHEST
    mono = source_audio[:, 0, :]
    frames = mono.reshape(B, T_FRAMES, FRAME)
    text = jnp.einsum("btf,fc->btc", frames, params["w_asr"], precision=hi)
    spectrogram = jnp.transpose(text, (0, 2, 1))
    pooled = jnp.mean(mel_spec, axis=-1)
    mean = jnp.dot(pooled, params["w_mu"], precision=hi)
    logvar = jnp.dot(pooled, params["w_lv"], precision=hi)
    std = jnp.exp(0.5 * logvar)
    result = mean + std * params["eps"]
    cond = jnp.dot(result, params["w_spk"], precision=hi) + params["b_spk"]
    h = text + cond[:, None, :]
    h = jnp.where(h > 0, h, 0.1 * h)
    out = jnp.einsum("btc,cu->btu", h, params["w_gen"], precision=hi)
    audio = jnp.tanh(out).reshape(B, 1, T_FRAMES * UP)
    return {
        "generated_audio": audio,
        "spectrogram": spectrogram,
        "speaker_info": result,
        "mean_info": mean,
        "std_info": std,
    }


# ---------------- main ---------------------------------------------------------
if __name__ == "__main__":
    key = jax.random.PRNGKey(0)
    k_src, k_mel, k_real, k_params = jax.random.split(key, 4)

    source_audio = jax.random.normal(k_src, (B, 1, S), jnp.float32)
    mel_spec = jax.random.normal(k_mel, (B, N_MELS, T_MEL), jnp.float32)
    real_audio = jax.random.normal(k_real, (B, 1, S), jnp.float32)

    params = init_params(k_params)

    fwd = jax.jit(hifivc_forward)
    out = fwd(params, source_audio, mel_spec, real_audio)
    jax.block_until_ready(out)

    # shape checks
    assert out["generated_audio"].shape == (B, 1, T_FRAMES * UP)
    assert out["spectrogram"].shape == (B, C_ASR, T_FRAMES)
    assert out["speaker_info"].shape == (B, D_SPK)
    assert out["mean_info"].shape == (B, D_SPK)
    assert out["std_info"].shape == (B, D_SPK)

    # numerical check vs. plain-JAX reference (loose tol: tolerant to MXU vs
    # XLA matmul pass differences, still catches any layout/packing bug)
    ref = reference_forward(params, source_audio, mel_spec)
    for name in ("generated_audio", "spectrogram", "speaker_info",
                 "mean_info", "std_info"):
        assert jnp.allclose(out[name], ref[name], atol=1e-2, rtol=1e-2), name

    print("KERNEL_OK")
</pallas_src>

<mosaic_0001>
module attributes {stable_mosaic.version = 11 : i64} {
  func.func @_hifivc_fused_kernel(%arg0: memref<16x128xf32, #tpu.memory_space<vmem>>, %arg1: memref<32x80xf32, #tpu.memory_space<vmem>>, %arg2: memref<136x128xf32, #tpu.memory_space<vmem>>, %arg3: memref<128x64xf32, #tpu.memory_space<vmem>>, %arg4: memref<64x128xf32, #tpu.memory_space<vmem>>, %arg5: memref<16x128xf32, #tpu.memory_space<vmem>>, %arg6: memref<16x128xf32, #tpu.memory_space<vmem>>) attributes {dimension_semantics = [], scalar_prefetch = 0 : i64, scratch_operands = 0 : i64, tpu.core_type = #tpu.core_type<tc>} {
    %c0 = arith.constant 0 : index
    %c0_0 = arith.constant 0 : index
    %0 = vector.load %arg2[%c0, %c0_0] : memref<136x128xf32, #tpu.memory_space<vmem>>, vector<80x32xf32>
    %c80 = arith.constant 80 : index
    %c0_1 = arith.constant 0 : index
    %1 = vector.load %arg2[%c80, %c0_1] : memref<136x128xf32, #tpu.memory_space<vmem>>, vector<16x64xf32>
    %c96 = arith.constant 96 : index
    %c0_2 = arith.constant 0 : index
    %2 = vector.load %arg2[%c96, %c0_2] : memref<136x128xf32, #tpu.memory_space<vmem>>, vector<1x64xf32>
    %c104 = arith.constant 104 : index
    %c0_3 = arith.constant 0 : index
    %3 = vector.load %arg2[%c104, %c0_3] : memref<136x128xf32, #tpu.memory_space<vmem>>, vector<2x16xf32>
    %c112 = arith.constant 112 : index
    %c0_4 = arith.constant 0 : index
    %4 = vector.load %arg2[%c112, %c0_4] : memref<136x128xf32, #tpu.memory_space<vmem>>, vector<16x2xf32>
    %c128 = arith.constant 128 : index
    %c0_5 = arith.constant 0 : index
    %5 = vector.load %arg2[%c128, %c0_5] : memref<136x128xf32, #tpu.memory_space<vmem>>, vector<2x32xf32>
    %c0_6 = arith.constant 0 : index
    %c0_7 = arith.constant 0 : index
    %6 = vector.load %arg0[%c0_6, %c0_7] : memref<16x128xf32, #tpu.memory_space<vmem>>, vector<16x128xf32>
    %c0_8 = arith.constant 0 : index
    %c0_9 = arith.constant 0 : index
    %7 = vector.load %arg3[%c0_8, %c0_9] : memref<128x64xf32, #tpu.memory_space<vmem>>, vector<128x64xf32>
    %cst = arith.constant dense<0.000000e+00> : vector<16x64xf32>
    %8 = tpu.matmul %6, %7, %cst {dimension_numbers = #tpu.dot_dimension_numbers<[1], [0], [0], [1], [0, 0, 1, 1], [], []>} : vector<16x128xf32>, vector<128x64xf32>, vector<16x64xf32> -> vector<16x64xf32>
    %c0_10 = arith.constant 0 : index
    %c0_11 = arith.constant 0 : index
    %9 = vector.load %arg1[%c0_10, %c0_11] : memref<32x80xf32, #tpu.memory_space<vmem>>, vector<32x80xf32>
    %cst_12 = arith.constant dense<0.000000e+00> : vector<2x80xf32>
    %10 = tpu.matmul %5, %9, %cst_12 {dimension_numbers = #tpu.dot_dimension_numbers<[1], [0], [0], [1], [0, 0, 1, 1], [], []>} : vector<2x32xf32>, vector<32x80xf32>, vector<2x80xf32> -> vector<2x80xf32>
    %cst_13 = arith.constant dense<0.000000e+00> : vector<2x32xf32>
    %11 = tpu.matmul %10, %0, %cst_13 {dimension_numbers = #tpu.dot_dimension_numbers<[1], [0], [0], [1], [0, 0, 1, 1], [], []>} : vector<2x80xf32>, vector<80x32xf32>, vector<2x32xf32> -> vector<2x32xf32>
    %12 = vector.extract_strided_slice %11 {offsets = [0, 0], sizes = [2, 16], strides = [1, 1]} : vector<2x32xf32> to vector<2x16xf32>
    %13 = vector.extract_strided_slice %11 {offsets = [0, 16], sizes = [2, 16], strides = [1, 1]} : vector<2x32xf32> to vector<2x16xf32>
    %cst_14 = arith.constant 5.000000e-01 : f32
    %14 = vector.broadcast %cst_14 : f32 to vector<2x16xf32>
    %15 = arith.mulf %14, %13 : vector<2x16xf32>
    %16 = math.exp %15 : vector<2x16xf32>
    %17 = arith.mulf %16, %3 : vector<2x16xf32>
    %18 = arith.addf %12, %17 : vector<2x16xf32>
    %cst_15 = arith.constant dense<0.000000e+00> : vector<2x64xf32>
    %19 = tpu.matmul %18, %1, %cst_15 {dimension_numbers = #tpu.dot_dimension_numbers<[1], [0], [0], [1], [0, 0, 1, 1], [], []>} : vector<2x16xf32>, vector<16x64xf32>, vector<2x64xf32> -> vector<2x64xf32>
    %20 = vector.broadcast %2 : vector<1x64xf32> to vector<2x64xf32>
    %21 = arith.addf %19, %20 : vector<2x64xf32>
    %cst_16 = arith.constant dense<0.000000e+00> : vector<16x64xf32>
    %22 = tpu.matmul %4, %21, %cst_16 {dimension_numbers = #tpu.dot_dimension_numbers<[1], [0], [0], [1], [0, 0, 1, 1], [], []>} : vector<16x2xf32>, vector<2x64xf32>, vector<16x64xf32> -> vector<16x64xf32>
    %23 = arith.addf %8, %22 : vector<16x64xf32>
    %cst_17 = arith.constant 0.000000e+00 : f32
    %24 = vector.broadcast %cst_17 : f32 to vector<16x64xf32>
    %25 = arith.cmpf ogt, %23, %24 : vector<16x64xf32>
    %cst_18 = arith.constant 1.000000e-01 : f32
    %26 = vector.broadcast %cst_18 : f32 to vector<16x64xf32>
    %27 = arith.mulf %26, %23 : vector<16x64xf32>
    %28 = arith.select %25, %23, %27 : vector<16x64xi1>, vector<16x64xf32>
    %c0_19 = arith.constant 0 : index
    %c0_20 = arith.constant 0 : index
    %29 = vector.load %arg4[%c0_19, %c0_20] : memref<64x128xf32, #tpu.memory_space<vmem>>, vector<64x128xf32>
    %cst_21 = arith.constant dense<0.000000e+00> : vector<16x128xf32>
    %30 = tpu.matmul %28, %29, %cst_21 {dimension_numbers = #tpu.dot_dimension_numbers<[1], [0], [0], [1], [0, 0, 1, 1], [], []>} : vector<16x64xf32>, vector<64x128xf32>, vector<16x128xf32> -> vector<16x128xf32>
    %31 = math.tanh %30 : vector<16x128xf32>
    %c0_22 = arith.constant 0 : index
    %c0_23 = arith.constant 0 : index
    %32 = vector.load %arg5[%c0_22, %c0_23] : memref<16x128xf32, #tpu.memory_space<vmem>>, vector<16x128xf32>
    tpu.vector_store %arg5[%c0_22, %c0_23], %31 {strides = array<i32>} : memref<16x128xf32, #tpu.memory_space<vmem>>, vector<16x128xf32>,
    %33 = tpu.concatenate %18, %12, %16 in 1 : vector<2x16xf32>, vector<2x16xf32>, vector<2x16xf32> -> vector<2x48xf32>
    %cst_24 = arith.constant 0.000000e+00 : f32
    %34 = vector.broadcast %cst_24 : f32 to vector<14x48xf32>
    %35 = tpu.concatenate %33, %34 in 0 : vector<2x48xf32>, vector<14x48xf32> -> vector<16x48xf32>
    %cst_25 = arith.constant 0.000000e+00 : f32
    %36 = vector.broadcast %cst_25 : f32 to vector<16x16xf32>
    %37 = tpu.concatenate %35, %36 in 1 : vector<16x48xf32>, vector<16x16xf32> -> vector<16x64xf32>
    %38 = tpu.concatenate %8, %37 in 1 : vector<16x64xf32>, vector<16x64xf32> -> vector<16x128xf32>
    %c0_26 = arith.constant 0 : index
    %c0_27 = arith.constant 0 : index
    %39 = vector.load %arg6[%c0_26, %c0_27] : memref<16x128xf32, #tpu.memory_space<vmem>>, vector<16x128xf32>
    tpu.vector_store %arg6[%c0_26, %c0_27], %38 {strides = array<i32>} : memref<16x128xf32, #tpu.memory_space<vmem>>, vector<16x128xf32>,
    return
  }
}

</mosaic_0001>

<llo_original>
// kernel: hifivc_forward.1
$region0: #{hifivc_forward.1}
  #allocation0 [shape = 'u32[]', space=smem, size = 0x4, offset = 0x4, fixed_abs, tag = 'smem constant byte address 0x4 - core index']
  #allocation1 [shape = 'u32[144,128]{1,0:T(1,128)}', space=vmem, size = 0x12000, scoped, tag = 'internal scratch']
  %s0 = inlined_call_operand.vmem [shape: f32[16,128], index: 0, kind: input, shape index: {}]
  %s1 = inlined_call_operand.vmem [shape: f32[32,80], index: 1, kind: input, shape index: {}]
  %s2 = inlined_call_operand.vmem [shape: f32[136,128], index: 2, kind: input, shape index: {}]
  %s3 = inlined_call_operand.vmem [shape: f32[128,64], index: 3, kind: input, shape index: {}]
  %s4 = inlined_call_operand.hbm [shape: f32[64,128], index: 4, kind: input, shape index: {}]
  %s5 = inlined_call_operand.hbm [shape: f32[16,128], index: 5, kind: output, shape index: {0}]
  %s6 = inlined_call_operand.vmem [shape: f32[16,128], index: 6, kind: output, shape index: {1}]
  %7 = xla_tuple %s5, %s6
  %s8 = sld [smem:[#allocation0]]
  $region42: #{hifivc_forward.1} parent=0
    _
  %s10 = ssub.s32 1, %s8
  %s11 = scalar_select 0, %s10, %s8
  $region1: #{hifivc_forward.1} parent=0
    #allocation2 [shape = 'u8[32768]{0}', space=vmem, size = 0x8000, scoped, tag = 'input window, operand 4, single buffered']
    #allocation3 [shape = 's32[1]{0}', space=sflag, size = 0x4, scoped, tag = 'scoped memory for hifivc_forward.1']
    #allocation4 [shape = 's32[1]{0}', space=sflag, size = 0x4, scoped, tag = 'scoped memory for hifivc_forward.1']
    #allocation5 [shape = 'u8[8192]{0}', space=vmem, size = 0x2000, scoped, tag = 'output window, operand 0, single buffered']
    %12 = vsyncpa [#allocation3], 0
    %13 = vsyncpa [#allocation4], 0
    // Predicated region
    $region2: #{hifivc_forward.1} parent=1 // pred_check
      _
    $region3: #{hifivc_forward.1} parent=1 // pred_check_branch
      %15 = sbr.rel (0) target = $region5
    $region4: #{hifivc_forward.1} parent=1 // pred_region
      _
    $region5: #{hifivc_forward.1} parent=1 // pred_fallthru
      _
    // Predicated region
    $region6: #{hifivc_forward.1} parent=1 // pred_check
      _
    $region7: #{hifivc_forward.1} parent=1 // pred_check_branch
      %17 = sbr.rel (0) target = $region9
    $region8: #{hifivc_forward.1} parent=1 // pred_region
      _
    $region9: #{hifivc_forward.1} parent=1 // pred_fallthru
      _
    // Predicated region
    $region10: #{hifivc_forward.1} parent=1 // pred_check
      _
    $region11: #{hifivc_forward.1} parent=1 // pred_check_branch
      %19 = sbr.rel (0) target = $region13
    $region12: #{hifivc_forward.1} parent=1 // pred_region
      _
    $region13: #{hifivc_forward.1} parent=1 // pred_fallthru
      _
    // Predicated region
    $region14: #{hifivc_forward.1} parent=1 // pred_check
      _
    $region15: #{hifivc_forward.1} parent=1 // pred_check_branch
      %21 = sbr.rel (0) target = $region17
    $region16: #{hifivc_forward.1} parent=1 // pred_region
      _
    $region17: #{hifivc_forward.1} parent=1 // pred_fallthru
      _
    // Predicated region
    $region18: #{hifivc_forward.1} parent=1 // pred_check
      _
    $region19: #{hifivc_forward.1} parent=1 // pred_check_branch
      %23 = sbr.rel (0) target = $region21
    $region20: #{hifivc_forward.1} parent=1 // pred_region
      %s25 = ssub.s32 1024, 1024
      %26 = vsyncadd [#allocation3], %s25
      %s27 = sshll.u32 [#allocation2], 4
      %s28 = int_to_ptr.vmem [resolvable:$true] %s27
      %33 = dma.hbm_to_vmem [thread:$0]  %s4, 1024, %s28, [#allocation3], 128, 128, 8
    $region21: #{hifivc_forward.1} parent=1 // pred_fallthru
      _
    // Predicated region
    $region22: #{hifivc_forward.1} parent=1 // pred_check
      _
    $region23: #{hifivc_forward.1} parent=1 // pred_check_branch
      %35 = sbr.rel (0) target = $region25
    $region24: #{hifivc_forward.1} parent=1 // pred_region
      %36 = dma.done [#allocation3], 1024
    $region25: #{hifivc_forward.1} parent=1 // pred_fallthru
      _
    %v37 = vld [vmem:[%s2] sm:$0xff]
    %v38 = vld [vmem:[%s2 + $0x8] sm:$0xff]
    %v39 = vld [vmem:[%s2 + $0x10] sm:$0xff]
    %v40 = vld [vmem:[%s2 + $0x18] sm:$0xff]
    %v41 = vld [vmem:[%s2 + $0x20] sm:$0xff]
    %v42 = vld [vmem:[%s2 + $0x28] sm:$0xff]
    %v43 = vld [vmem:[%s2 + $0x30] sm:$0xff]
    %v44 = vld [vmem:[%s2 + $0x38] sm:$0xff]
    %v45 = vld [vmem:[%s2 + $0x40] sm:$0xff]
    %v46 = vld [vmem:[%s2 + $0x48] sm:$0xff]
    %v47 = vld [vmem:[%s2 + $0x50] sm:$0xff]
    %v48 = vld [vmem:[%s2 + $0x58] sm:$0xff]
    %v49 = vld [vmem:[%s2 + $0x60] sm:$0x1]
    %v50 = vld [vmem:[%s2 + $0x68] sm:$0x3]
    %v51 = vld [vmem:[%s2 + $0x70] sm:$0xff]
    %v52 = vld [vmem:[%s2 + $0x78] sm:$0xff]
    %v53 = vld [vmem:[%s2 + $0x80] sm:$0x3]
    %v54 = vld [vmem:[%s0] sm:$0xff]
    %v55 = vld [vmem:[%s0 + $0x8] sm:$0xff]
    %v56 = vld [vmem:[%s3] sm:$0xff]
    %v57 = vld [vmem:[%s3 + $0x8] sm:$0xff]
    %v58 = vld [vmem:[%s3 + $0x10] sm:$0xff]
    %v59 = vld [vmem:[%s3 + $0x18] sm:$0xff]
    %v60 = vld [vmem:[%s3 + $0x20] sm:$0xff]
    %v61 = vld [vmem:[%s3 + $0x28] sm:$0xff]
    %v62 = vld [vmem:[%s3 + $0x30] sm:$0xff]
    %v63 = vld [vmem:[%s3 + $0x38] sm:$0xff]
    %v64 = vld [vmem:[%s3 + $0x40] sm:$0xff]
    %v65 = vld [vmem:[%s3 + $0x48] sm:$0xff]
    %v66 = vld [vmem:[%s3 + $0x50] sm:$0xff]
    %v67 = vld [vmem:[%s3 + $0x58] sm:$0xff]
    %v68 = vld [vmem:[%s3 + $0x60] sm:$0xff]
    %v69 = vld [vmem:[%s3 + $0x68] sm:$0xff]
    %v70 = vld [vmem:[%s3 + $0x70] sm:$0xff]
    %v71 = vld [vmem:[%s3 + $0x78] sm:$0xff]
    %72 = vmatprep.subr.mxu0 0.0
    %73 = vmatpush1.msra.mxu0 %v71
    %74 = vmatprep.subr.mxu0 0.0
    %75 = vmatpush1.msra.mxu0 %v70
    %76 = vmatprep.subr.mxu0 0.0
    %77 = vmatpush1.msra.mxu0 %v69
    %78 = vmatprep.subr.mxu0 0.0
    %79 = vmatpush1.msra.mxu0 %v68
    %80 = vmatprep.subr.mxu0 0.0
    %81 = vmatpush1.msra.mxu0 %v67
    %82 = vmatprep.subr.mxu0 0.0
    %83 = vmatpush1.msra.mxu0 %v66
    %84 = vmatprep.subr.mxu0 0.0
    %85 = vmatpush1.msra.mxu0 %v65
    %86 = vmatprep.subr.mxu0 0.0
    %87 = vmatpush1.msra.mxu0 %v64
    %88 = vmatprep.subr.mxu0 0.0
    %89 = vmatpush1.msra.mxu0 %v63
    %90 = vmatprep.subr.mxu0 0.0
    %91 = vmatpush1.msra.mxu0 %v62
    %92 = vmatprep.subr.mxu0 0.0
    %93 = vmatpush1.msra.mxu0 %v61
    %94 = vmatprep.subr.mxu0 0.0
    %95 = vmatpush1.msra.mxu0 %v60
    %96 = vmatprep.subr.mxu0 0.0
    %97 = vmatpush1.msra.mxu0 %v59
    %98 = vmatprep.subr.mxu0 0.0
    %99 = vmatpush1.msra.mxu0 %v58
    %100 = vmatprep.subr.mxu0 0.0
    %101 = vmatpush1.msra.mxu0 %v57
    %102 = vmatprep.subr.mxu0 0.0
    %103 = vmatpush1.msra.mxu0 %v56
    %104 = vmatprep.subr.mxu0 0.0
    %105 = vmatpush2.msra.mxu0 0.0
    %106 = vmatprep.subr.mxu0 0.0
    %107 = vmatpush2.msra.mxu0 0.0
    %108 = vmatprep.subr.mxu0 0.0
    %109 = vmatpush2.msra.mxu0 0.0
    %110 = vmatprep.subr.mxu0 0.0
    %111 = vmatpush2.msra.mxu0 0.0
    %112 = vmatprep.subr.mxu0 0.0
    %113 = vmatpush2.msra.mxu0 0.0
    %114 = vmatprep.subr.mxu0 0.0
    %115 = vmatpush2.msra.mxu0 0.0
    %116 = vmatprep.subr.mxu0 0.0
    %117 = vmatpush2.msra.mxu0 0.0
    %118 = vmatprep.subr.mxu0 0.0
    %119 = vmatpush2.msra.mxu0 0.0
    %120 = vmatprep.subr.mxu0 0.0
    %121 = vmatpush2.msra.mxu0 0.0
    %122 = vmatprep.subr.mxu0 0.0
    %123 = vmatpush2.msra.mxu0 0.0
    %124 = vmatprep.subr.mxu0 0.0
    %125 = vmatpush2.msra.mxu0 0.0
    %126 = vmatprep.subr.mxu0 0.0
    %127 = vmatpush2.msra.mxu0 0.0
    %128 = vmatprep.subr.mxu0 0.0
    %129 = vmatpush2.msra.mxu0 0.0
    %130 = vmatprep.subr.mxu0 0.0
    %131 = vmatpush2.msra.mxu0 0.0
    %132 = vmatprep.subr.mxu0 0.0
    %133 = vmatpush2.msra.mxu0 0.0
    %134 = vmatprep.subr.mxu0 0.0
    %135 = vmatpush2.msra.mxu0 0.0
    %136 = vmatprep.mubr.f32.mxu0 0.0
    %137 = vmatmul.mubr.f32.gmra.mxu0 %v54
    %v138 = vpop.f32.mrf.mxu0
    %v139 = vadd.f32 0.0, %v138
    %v140 = vpop.f32.mrf.mxu0
    %141 = vmatprep.mubr.f32.mxu0 0.0
    %142 = vmatmul.mubr.f32.gmra.mxu0 %v55
    %v143 = vpop.f32.mrf.mxu0
    %v144 = vadd.f32 0.0, %v143
    %v145 = vpop.f32.mrf.mxu0
    %146 = vdwg.mxu0
    %v147 = vld [vmem:[%s1] sm:$0xff]
    %v148 = vld [vmem:[%s1 + $0x8] sm:$0xff]
    %v149 = vld [vmem:[%s1 + $0x10] sm:$0xff]
    %v150 = vld [vmem:[%s1 + $0x18] sm:$0xff]
    %vm151 = vcmask 261120
    %v153 = vsel %vm151, %v53, 0
    %155 = vmatprep.subr.mxu0 0.0
    %156 = vmatpush1.msra.mxu0 0.0
    %157 = vmatprep.subr.mxu0 0.0
    %158 = vmatpush1.msra.mxu0 0.0
    %159 = vmatprep.subr.mxu0 0.0
    %160 = vmatpush1.msra.mxu0 0.0
    %161 = vmatprep.subr.mxu0 0.0
    %162 = vmatpush1.msra.mxu0 0.0
    %163 = vmatprep.subr.mxu0 0.0
    %164 = vmatpush1.msra.mxu0 0.0
    %165 = vmatprep.subr.mxu0 0.0
    %166 = vmatpush1.msra.mxu0 0.0
    %167 = vmatprep.subr.mxu0 0.0
    %168 = vmatpush1.msra.mxu0 0.0
    %169 = vmatprep.subr.mxu0 0.0
    %170 = vmatpush1.msra.mxu0 0.0
    %171 = vmatprep.subr.mxu0 0.0
    %172 = vmatpush1.msra.mxu0 0.0
    %173 = vmatprep.subr.mxu0 0.0
    %174 = vmatpush1.msra.mxu0 0.0
    %175 = vmatprep.subr.mxu0 0.0
    %176 = vmatpush1.msra.mxu0 0.0
    %177 = vmatprep.subr.mxu0 0.0
    %178 = vmatpush1.msra.mxu0 0.0
    %179 = vmatprep.subr.mxu0 0.0
    %180 = vmatpush1.msra.mxu0 %v150
    %181 = vmatprep.subr.mxu0 0.0
    %182 = vmatpush1.msra.mxu0 %v149
    %183 = vmatprep.subr.mxu0 0.0
    %184 = vmatpush1.msra.mxu0 %v148
    %185 = vmatprep.subr.mxu0 0.0
    %186 = vmatpush1.msra.mxu0 %v147
    %187 = vmatprep.subr.mxu0 0.0
    %188 = vmatpush2.msra.mxu0 0.0
    %189 = vmatprep.subr.mxu0 0.0
    %190 = vmatpush2.msra.mxu0 0.0
    %191 = vmatprep.subr.mxu0 0.0
    %192 = vmatpush2.msra.mxu0 0.0
    %193 = vmatprep.subr.mxu0 0.0
    %194 = vmatpush2.msra.mxu0 0.0
    %195 = vmatprep.subr.mxu0 0.0
    %196 = vmatpush2.msra.mxu0 0.0
    %197 = vmatprep.subr.mxu0 0.0
    %198 = vmatpush2.msra.mxu0 0.0
    %199 = vmatprep.subr.mxu0 0.0
    %200 = vmatpush2.msra.mxu0 0.0
    %201 = vmatprep.subr.mxu0 0.0
    %202 = vmatpush2.msra.mxu0 0.0
    %203 = vmatprep.subr.mxu0 0.0
    %204 = vmatpush2.msra.mxu0 0.0
    %205 = vmatprep.subr.mxu0 0.0
    %206 = vmatpush2.msra.mxu0 0.0
    %207 = vmatprep.subr.mxu0 0.0
    %208 = vmatpush2.msra.mxu0 0.0
    %209 = vmatprep.subr.mxu0 0.0
    %210 = vmatpush2.msra.mxu0 0.0
    %211 = vmatprep.subr.mxu0 0.0
    %212 = vmatpush2.msra.mxu0 0.0
    %213 = vmatprep.subr.mxu0 0.0
    %214 = vmatpush2.msra.mxu0 0.0
    %215 = vmatprep.subr.mxu0 0.0
    %216 = vmatpush2.msra.mxu0 0.0
    %217 = vmatprep.subr.mxu0 0.0
    %218 = vmatpush2.msra.mxu0 0.0
    %219 = vmatprep.mubr.f32.mxu0 0.0
    %220 = vmatmul.mubr.f32.gmra.mxu0 %v153
    %v221 = vpop.f32.mrf.mxu0
    %v222 = vadd.f32 0.0, %v221
    %v223 = vpop.f32.mrf.mxu0
    %224 = vdwg.mxu0
    %vm225 = vcmask 654336
    %v227 = vsel %vm225, %v222, 0
    %229 = vmatprep.subr.mxu0 0.0
    %230 = vmatpush1.msra.mxu0 0.0
    %231 = vmatprep.subr.mxu0 0.0
    %232 = vmatpush1.msra.mxu0 0.0
    %233 = vmatprep.subr.mxu0 0.0
    %234 = vmatpush1.msra.mxu0 0.0
    %235 = vmatprep.subr.mxu0 0.0
    %236 = vmatpush1.msra.mxu0 0.0
    %237 = vmatprep.subr.mxu0 0.0
    %238 = vmatpush1.msra.mxu0 0.0
    %239 = vmatprep.subr.mxu0 0.0
    %240 = vmatpush1.msra.mxu0 0.0
    %241 = vmatprep.subr.mxu0 0.0
    %242 = vmatpush1.msra.mxu0 %v46
    %243 = vmatprep.subr.mxu0 0.0
    %244 = vmatpush1.msra.mxu0 %v45
    %245 = vmatprep.subr.mxu0 0.0
    %246 = vmatpush1.msra.mxu0 %v44
    %247 = vmatprep.subr.mxu0 0.0
    %248 = vmatpush1.msra.mxu0 %v43
    %249 = vmatprep.subr.mxu0 0.0
    %250 = vmatpush1.msra.mxu0 %v42
    %251 = vmatprep.subr.mxu0 0.0
    %252 = vmatpush1.msra.mxu0 %v41
    %253 = vmatprep.subr.mxu0 0.0
    %254 = vmatpush1.msra.mxu0 %v40
    %255 = vmatprep.subr.mxu0 0.0
    %256 = vmatpush1.msra.mxu0 %v39
    %257 = vmatprep.subr.mxu0 0.0
    %258 = vmatpush1.msra.mxu0 %v38
    %259 = vmatprep.subr.mxu0 0.0
    %260 = vmatpush1.msra.mxu0 %v37
    %261 = vmatprep.subr.mxu0 0.0
    %262 = vmatpush2.msra.mxu0 0.0
    %263 = vmatprep.subr.mxu0 0.0
    %264 = vmatpush2.msra.mxu0 0.0
    %265 = vmatprep.subr.mxu0 0.0
    %266 = vmatpush2.msra.mxu0 0.0
    %267 = vmatprep.subr.mxu0 0.0
    %268 = vmatpush2.msra.mxu0 0.0
    %269 = vmatprep.subr.mxu0 0.0
    %270 = vmatpush2.msra.mxu0 0.0
    %271 = vmatprep.subr.mxu0 0.0
    %272 = vmatpush2.msra.mxu0 0.0
    %273 = vmatprep.subr.mxu0 0.0
    %274 = vmatpush2.msra.mxu0 0.0
    %275 = vmatprep.subr.mxu0 0.0
    %276 = vmatpush2.msra.mxu0 0.0
    %277 = vmatprep.subr.mxu0 0.0
    %278 = vmatpush2.msra.mxu0 0.0
    %279 = vmatprep.subr.mxu0 0.0
    %280 = vmatpush2.msra.mxu0 0.0
    %281 = vmatprep.subr.mxu0 0.0
    %282 = vmatpush2.msra.mxu0 0.0
    %283 = vmatprep.subr.mxu0 0.0
    %284 = vmatpush2.msra.mxu0 0.0
    %285 = vmatprep.subr.mxu0 0.0
    %286 = vmatpush2.msra.mxu0 0.0
    %287 = vmatprep.subr.mxu0 0.0
    %288 = vmatpush2.msra.mxu0 0.0
    %289 = vmatprep.subr.mxu0 0.0
    %290 = vmatpush2.msra.mxu0 0.0
    %291 = vmatprep.subr.mxu0 0.0
    %292 = vmatpush2.msra.mxu0 0.0
    %293 = vmatprep.mubr.f32.mxu0 0.0
    %294 = vmatmul.mubr.f32.gmra.mxu0 %v227
    %v295 = vpop.f32.mrf.mxu0
    %v296 = vadd.f32 0.0, %v295
    %v297 = vpop.f32.mrf.mxu0
    %298 = vdwg.mxu0
    %v299 = vmul.f32 %v296, 0.5
    %v300 = vmul.f32 %v299, 1.442695
    %v301 = vpow.pop %v300
    %303 = vrot.lane.b32.xlu0 %v50, 16
    %v304 = vpop.permute.xlu0 %303
    %v306 = vmul.f32 %v301, %v304
    %308 = vrot.lane.b32.xlu0 %v306, 112
    %v309 = vpop.permute.xlu0 %308
    %v311 = vadd.f32 %v296, %v309
    %v312 = vlaneseq
    %v313 = vshrl.u32 %v312, 7
    %v314 = vsub.s32 0, %v313
    %v315 = vrot.slane %v49, %v314
    %vm316 = vcmask 130048
    %v318 = vsel %vm316, %v311, 0
    %320 = vmatprep.subr.mxu0 0.0
    %321 = vmatpush1.msra.mxu0 0.0
    %322 = vmatprep.subr.mxu0 0.0
    %323 = vmatpush1.msra.mxu0 0.0
    %324 = vmatprep.subr.mxu0 0.0
    %325 = vmatpush1.msra.mxu0 0.0
    %326 = vmatprep.subr.mxu0 0.0
    %327 = vmatpush1.msra.mxu0 0.0
    %328 = vmatprep.subr.mxu0 0.0
    %329 = vmatpush1.msra.mxu0 0.0
    %330 = vmatprep.subr.mxu0 0.0
    %331 = vmatpush1.msra.mxu0 0.0
    %332 = vmatprep.subr.mxu0 0.0
    %333 = vmatpush1.msra.mxu0 0.0
    %334 = vmatprep.subr.mxu0 0.0
    %335 = vmatpush1.msra.mxu0 0.0
    %336 = vmatprep.subr.mxu0 0.0
    %337 = vmatpush1.msra.mxu0 0.0
    %338 = vmatprep.subr.mxu0 0.0
    %339 = vmatpush1.msra.mxu0 0.0
    %340 = vmatprep.subr.mxu0 0.0
    %341 = vmatpush1.msra.mxu0 0.0
    %342 = vmatprep.subr.mxu0 0.0
    %343 = vmatpush1.msra.mxu0 0.0
    %344 = vmatprep.subr.mxu0 0.0
    %345 = vmatpush1.msra.mxu0 0.0
    %346 = vmatprep.subr.mxu0 0.0
    %347 = vmatpush1.msra.mxu0 0.0
    %348 = vmatprep.subr.mxu0 0.0
    %349 = vmatpush1.msra.mxu0 %v48
    %350 = vmatprep.subr.mxu0 0.0
    %351 = vmatpush1.msra.mxu0 %v47
    %352 = vmatprep.subr.mxu0 0.0
    %353 = vmatpush2.msra.mxu0 0.0
    %354 = vmatprep.subr.mxu0 0.0
    %355 = vmatpush2.msra.mxu0 0.0
    %356 = vmatprep.subr.mxu0 0.0
    %357 = vmatpush2.msra.mxu0 0.0
    %358 = vmatprep.subr.mxu0 0.0
    %359 = vmatpush2.msra.mxu0 0.0
    %360 = vmatprep.subr.mxu0 0.0
    %361 = vmatpush2.msra.mxu0 0.0
    %362 = vmatprep.subr.mxu0 0.0
    %363 = vmatpush2.msra.mxu0 0.0
    %364 = vmatprep.subr.mxu0 0.0
    %365 = vmatpush2.msra.mxu0 0.0
    %366 = vmatprep.subr.mxu0 0.0
    %367 = vmatpush2.msra.mxu0 0.0
    %368 = vmatprep.subr.mxu0 0.0
    %369 = vmatpush2.msra.mxu0 0.0
    %370 = vmatprep.subr.mxu0 0.0
    %371 = vmatpush2.msra.mxu0 0.0
    %372 = vmatprep.subr.mxu0 0.0
    %373 = vmatpush2.msra.mxu0 0.0
    %374 = vmatprep.subr.mxu0 0.0
    %375 = vmatpush2.msra.mxu0 0.0
    %376 = vmatprep.subr.mxu0 0.0
    %377 = vmatpush2.msra.mxu0 0.0
    %378 = vmatprep.subr.mxu0 0.0
    %379 = vmatpush2.msra.mxu0 0.0
    %380 = vmatprep.subr.mxu0 0.0
    %381 = vmatpush2.msra.mxu0 0.0
    %382 = vmatprep.subr.mxu0 0.0
    %383 = vmatpush2.msra.mxu0 0.0
    %384 = vmatprep.mubr.f32.mxu0 0.0
    %385 = vmatmul.mubr.f32.gmra.mxu0 %v318
    %v386 = vpop.f32.mrf.mxu0
    %v387 = vadd.f32 %v315, %v386
    %v388 = vpop.f32.mrf.mxu0
    %389 = vdwg.mxu0
    %vm390 = vcmask 15360
    %v392 = vsel %vm390, %v51, 0
    %v395 = vsel %vm390, %v52, 0
    %vm397 = vcmask 1041408
    %v399 = vsel %vm397, %v387, 0
    %401 = vmatprep.subr.mxu0 0.0
    %402 = vmatpush1.msra.mxu0 0.0
    %403 = vmatprep.subr.mxu0 0.0
    %404 = vmatpush1.msra.mxu0 0.0
    %405 = vmatprep.subr.mxu0 0.0
    %406 = vmatpush1.msra.mxu0 0.0
    %407 = vmatprep.subr.mxu0 0.0
    %408 = vmatpush1.msra.mxu0 0.0
    %409 = vmatprep.subr.mxu0 0.0
    %410 = vmatpush1.msra.mxu0 0.0
    %411 = vmatprep.subr.mxu0 0.0
    %412 = vmatpush1.msra.mxu0 0.0
    %413 = vmatprep.subr.mxu0 0.0
    %414 = vmatpush1.msra.mxu0 0.0
    %415 = vmatprep.subr.mxu0 0.0
    %416 = vmatpush1.msra.mxu0 0.0
    %417 = vmatprep.subr.mxu0 0.0
    %418 = vmatpush1.msra.mxu0 0.0
    %419 = vmatprep.subr.mxu0 0.0
    %420 = vmatpush1.msra.mxu0 0.0
    %421 = vmatprep.subr.mxu0 0.0
    %422 = vmatpush1.msra.mxu0 0.0
    %423 = vmatprep.subr.mxu0 0.0
    %424 = vmatpush1.msra.mxu0 0.0
    %425 = vmatprep.subr.mxu0 0.0
    %426 = vmatpush1.msra.mxu0 0.0
    %427 = vmatprep.subr.mxu0 0.0
    %428 = vmatpush1.msra.mxu0 0.0
    %429 = vmatprep.subr.mxu0 0.0
    %430 = vmatpush1.msra.mxu0 0.0
    %431 = vmatprep.subr.mxu0 0.0
    %432 = vmatpush1.msra.mxu0 %v399
    %433 = vmatprep.subr.mxu0 0.0
    %434 = vmatpush2.msra.mxu0 0.0
    %435 = vmatprep.subr.mxu0 0.0
    %436 = vmatpush2.msra.mxu0 0.0
    %437 = vmatprep.subr.mxu0 0.0
    %438 = vmatpush2.msra.mxu0 0.0
    %439 = vmatprep.subr.mxu0 0.0
    %440 = vmatpush2.msra.mxu0 0.0
    %441 = vmatprep.subr.mxu0 0.0
    %442 = vmatpush2.msra.mxu0 0.0
    %443 = vmatprep.subr.mxu0 0.0
    %444 = vmatpush2.msra.mxu0 0.0
    %445 = vmatprep.subr.mxu0 0.0
    %446 = vmatpush2.msra.mxu0 0.0
    %447 = vmatprep.subr.mxu0 0.0
    %448 = vmatpush2.msra.mxu0 0.0
    %449 = vmatprep.subr.mxu0 0.0
    %450 = vmatpush2.msra.mxu0 0.0
    %451 = vmatprep.subr.mxu0 0.0
    %452 = vmatpush2.msra.mxu0 0.0
    %453 = vmatprep.subr.mxu0 0.0
    %454 = vmatpush2.msra.mxu0 0.0
    %455 = vmatprep.subr.mxu0 0.0
    %456 = vmatpush2.msra.mxu0 0.0
    %457 = vmatprep.subr.mxu0 0.0
    %458 = vmatpush2.msra.mxu0 0.0
    %459 = vmatprep.subr.mxu0 0.0
    %460 = vmatpush2.msra.mxu0 0.0
    %461 = vmatprep.subr.mxu0 0.0
    %462 = vmatpush2.msra.mxu0 0.0
    %463 = vmatprep.subr.mxu0 0.0
    %464 = vmatpush2.msra.mxu0 0.0
    %465 = vmatprep.mubr.f32.mxu0 0.0
    %466 = vmatmul.mubr.f32.gmra.mxu0 %v392
    %v467 = vpop.f32.mrf.mxu0
    %v468 = vadd.f32 0.0, %v467
    %v469 = vpop.f32.mrf.mxu0
    %470 = vmatprep.mubr.f32.mxu0 0.0
    %471 = vmatmul.mubr.f32.gmra.mxu0 %v395
    %v472 = vpop.f32.mrf.mxu0
    %v473 = vadd.f32 0.0, %v472
    %v474 = vpop.f32.mrf.mxu0
    %475 = vdwg.mxu0
    %v476 = vadd.f32 %v139, %v468
    %v477 = vadd.f32 %v144, %v473
    %vm478 = vcmp.gt.f32.partialorder %v476, 0.0
    %vm479 = vcmp.gt.f32.partialorder %v477, 0.0
    %v480 = vmul.f32 %v476, 0.1
    %v481 = vmul.f32 %v477, 0.1
    %v482 = vsel %vm478, %v476, %v480
    %v483 = vsel %vm479, %v477, %v481
    %v484 = vld [vmem:[#allocation2] sm:$0xff]
    %v485 = vld [vmem:[#allocation2 + $0x8] sm:$0xff]
    %v486 = vld [vmem:[#allocation2 + $0x10] sm:$0xff]
    %v487 = vld [vmem:[#allocation2 + $0x18] sm:$0xff]
    %v488 = vld [vmem:[#allocation2 + $0x20] sm:$0xff]
    %v489 = vld [vmem:[#allocation2 + $0x28] sm:$0xff]
    %v490 = vld [vmem:[#allocation2 + $0x30] sm:$0xff]
    %v491 = vld [vmem:[#allocation2 + $0x38] sm:$0xff]
    %vm492 = vcmask 523264
    %v494 = vsel %vm492, %v482, 0
    %v497 = vsel %vm492, %v483, 0
    %499 = vmatprep.subr.mxu0 0.0
    %500 = vmatpush1.msra.mxu0 0.0
    %501 = vmatprep.subr.mxu0 0.0
    %502 = vmatpush1.msra.mxu0 0.0
    %503 = vmatprep.subr.mxu0 0.0
    %504 = vmatpush1.msra.mxu0 0.0
    %505 = vmatprep.subr.mxu0 0.0
    %506 = vmatpush1.msra.mxu0 0.0
    %507 = vmatprep.subr.mxu0 0.0
    %508 = vmatpush1.msra.mxu0 0.0
    %509 = vmatprep.subr.mxu0 0.0
    %510 = vmatpush1.msra.mxu0 0.0
    %511 = vmatprep.subr.mxu0 0.0
    %512 = vmatpush1.msra.mxu0 0.0
    %513 = vmatprep.subr.mxu0 0.0
    %514 = vmatpush1.msra.mxu0 0.0
    %515 = vmatprep.subr.mxu0 0.0
    %516 = vmatpush1.msra.mxu0 %v491
    %517 = vmatprep.subr.mxu0 0.0
    %518 = vmatpush1.msra.mxu0 %v490
    %519 = vmatprep.subr.mxu0 0.0
    %520 = vmatpush1.msra.mxu0 %v489
    %521 = vmatprep.subr.mxu0 0.0
    %522 = vmatpush1.msra.mxu0 %v488
    %523 = vmatprep.subr.mxu0 0.0
    %524 = vmatpush1.msra.mxu0 %v487
    %525 = vmatprep.subr.mxu0 0.0
    %526 = vmatpush1.msra.mxu0 %v486
    %527 = vmatprep.subr.mxu0 0.0
    %528 = vmatpush1.msra.mxu0 %v485
    %529 = vmatprep.subr.mxu0 0.0
    %530 = vmatpush1.msra.mxu0 %v484
    %531 = vmatprep.subr.mxu0 0.0
    %532 = vmatpush2.msra.mxu0 0.0
    %533 = vmatprep.subr.mxu0 0.0
    %534 = vmatpush2.msra.mxu0 0.0
    %535 = vmatprep.subr.mxu0 0.0
    %536 = vmatpush2.msra.mxu0 0.0
    %537 = vmatprep.subr.mxu0 0.0
    %538 = vmatpush2.msra.mxu0 0.0
    %539 = vmatprep.subr.mxu0 0.0
    %540 = vmatpush2.msra.mxu0 0.0
    %541 = vmatprep.subr.mxu0 0.0
    %542 = vmatpush2.msra.mxu0 0.0
    %543 = vmatprep.subr.mxu0 0.0
    %544 = vmatpush2.msra.mxu0 0.0
    %545 = vmatprep.subr.mxu0 0.0
    %546 = vmatpush2.msra.mxu0 0.0
    %547 = vmatprep.subr.mxu0 0.0
    %548 = vmatpush2.msra.mxu0 0.0
    %549 = vmatprep.subr.mxu0 0.0
    %550 = vmatpush2.msra.mxu0 0.0
    %551 = vmatprep.subr.mxu0 0.0
    %552 = vmatpush2.msra.mxu0 0.0
    %553 = vmatprep.subr.mxu0 0.0
    %554 = vmatpush2.msra.mxu0 0.0
    %555 = vmatprep.subr.mxu0 0.0
    %556 = vmatpush2.msra.mxu0 0.0
    %557 = vmatprep.subr.mxu0 0.0
    %558 = vmatpush2.msra.mxu0 0.0
    %559 = vmatprep.subr.mxu0 0.0
    %560 = vmatpush2.msra.mxu0 0.0
    %561 = vmatprep.subr.mxu0 0.0
    %562 = vmatpush2.msra.mxu0 0.0
    %563 = vmatprep.mubr.f32.mxu0 0.0
    %564 = vmatmul.mubr.f32.gmra.mxu0 %v494
    %v565 = vpop.f32.mrf.mxu0
    %v566 = vadd.f32 0.0, %v565
    %v567 = vpop.f32.mrf.mxu0
    %568 = vmatprep.mubr.f32.mxu0 0.0
    %569 = vmatmul.mubr.f32.gmra.mxu0 %v497
    %v570 = vpop.f32.mrf.mxu0
    %v571 = vadd.f32 0.0, %v570
    %v572 = vpop.f32.mrf.mxu0
    %573 = vdwg.mxu0
    %v574 = vtanh.pop %v566
    %v575 = vtanh.pop %v571
    %576 = vst [vmem:[#allocation5] sm:$0xff] %v574
    %577 = vst [vmem:[#allocation5 + $0x8] sm:$0xff] %v575
    %579 = vrot.lane.b32.xlu0 %v296, 16
    %v580 = vpop.permute.xlu0 %579
    %583 = vrot.lane.b32.xlu0 %v301, 16
    %v584 = vpop.permute.xlu0 %583
    %v586 = vsel %vm316, %v311, %v580
    %v587 = vsel %vm151, %v586, %v584
    %v588 = vsel %vm397, %v587, 0.0
    %vm589 = vcmask 392192
    %v590 = vsel %vm589, %v588, 0.0
    %593 = vrot.lane.b32.xlu0 %v590, 64
    %v594 = vpop.permute.xlu0 %593
    %595 = vrot.lane.b32.xlu0 0.0, 64
    %v596 = vpop.permute.xlu0 %595
    %v599 = vsel %vm492, %v139, %v594
    %v600 = vsel %vm492, %v144, %v596
    %601 = vst [vmem:[%s6] sm:$0xff] %v599
    %602 = vst [vmem:[%s6 + $0x8] sm:$0xff] %v600
    // Predicated region
    $region26: #{hifivc_forward.1} parent=1 // pred_check
      _
    $region27: #{hifivc_forward.1} parent=1 // pred_check_branch
      %604 = sbr.rel (0) target = $region29
    $region28: #{hifivc_forward.1} parent=1 // pred_region
      %s606 = ssub.s32 256, 256
      %607 = vsyncadd [#allocation4], %s606
      %s608 = sshll.u32 [#allocation5], 4
      %s609 = int_to_ptr.vmem [resolvable:$true] %s608
      %614 = dma.vmem_to_hbm [thread:$0]  %s609, 256, %s5, [#allocation4], 128, 128, 8
    $region29: #{hifivc_forward.1} parent=1 // pred_fallthru
      _
    // Predicated region
    $region30: #{hifivc_forward.1} parent=1 // pred_check
      _
    $region31: #{hifivc_forward.1} parent=1 // pred_check_branch
      %616 = sbr.rel (0) target = $region33
    $region32: #{hifivc_forward.1} parent=1 // pred_region
      _
    $region33: #{hifivc_forward.1} parent=1 // pred_fallthru
      _
    // Predicated region
    $region34: #{hifivc_forward.1} parent=1 // pred_check
      _
    $region35: #{hifivc_forward.1} parent=1 // pred_check_branch
      %618 = sbr.rel (0) target = $region37
    $region36: #{hifivc_forward.1} parent=1 // pred_region
      %619 = dma.done [#allocation4], 256
    $region37: #{hifivc_forward.1} parent=1 // pred_fallthru
      _
    // Predicated region
    $region38: #{hifivc_forward.1} parent=1 // pred_check
      _
    $region39: #{hifivc_forward.1} parent=1 // pred_check_branch
      %621 = sbr.rel (0) target = $region41
    $region40: #{hifivc_forward.1} parent=1 // pred_region
      _
    $region41: #{hifivc_forward.1} parent=1 // pred_fallthru
      _
    %622 = vsyncpa [#allocation3], 1
    %623 = vsyncpa [#allocation4], 1

</llo_original>
